<compile_context>
chip_gen: v7x
topology: tpu7x:2x2x1
jax: 0.10.0
libtpu: 0.0.40
codegen_flags: <defaults>
</compile_context>

<pallas_src>
import numpy as np
import jax
import jax.numpy as jnp
from jax.experimental import pallas as pl
from jax.experimental.pallas import tpu as pltpu

_LOG_2PI = float(np.log(2.0 * np.pi))


def _softplus(x):
    # numerically stable softplus, matches torch.nn.functional.softplus
    return jnp.maximum(x, 0.0) + jnp.log1p(jnp.exp(-jnp.abs(x)))


def _round_up(a, b):
    return ((a + b - 1) // b) * b


def mf_forward_kernel(x_ref, zi_ref, eps_z_ref,
                      z_rho_ref, th_loc_ref, th_rho_ref, eps_th_ref,
                      ga_loc_ref, ga_rho_ref, eps_ga_ref,
                      scalars_ref, out_ref,
                      theta_s, zscale_s, invscale_s, acc_s):
    c = pl.program_id(0)          # core-split ("parallel") axis
    i = pl.program_id(1)          # row-tile ("arbitrary"/accumulation) axis
    af = scalars_ref[0]
    inv_num_batches = scalars_ref[1]
    n_valid = scalars_ref[2]
    num_feats = x_ref.shape[-1]

    # ---- once per core-split: sample theta/gamma, cache scales, init acc ----
    @pl.when(i == 0)
    def _init():
        z_scale = _softplus(z_rho_ref[...].astype(jnp.float32))            # (1, L)
        zscale_s[...] = z_scale
        th_scale = _softplus(th_rho_ref[...].astype(jnp.float32))          # (L, P)
        theta_s[...] = (th_loc_ref[...].astype(jnp.float32)
                        + th_scale * eps_th_ref[...].astype(jnp.float32))
        ga_scale = _softplus(ga_rho_ref[...].astype(jnp.float32))          # (1, P)
        gamma = (ga_loc_ref[...].astype(jnp.float32)
                 + ga_scale * eps_ga_ref[...].astype(jnp.float32))
        obs_scale = 1e-15 + _softplus(gamma)                               # (1, P)
        invscale_s[...] = 1.0 / obs_scale
        acc_s[0] = 0.0

        # grid-invariant part of -elbo, added exactly once (core-split 0 only)
        @pl.when(c == 0)
        def _consts():
            th_loc = th_loc_ref[...].astype(jnp.float32)
            ga_loc = ga_loc_ref[...].astype(jnp.float32)
            # KL(Normal(mu, sigma) || Normal(0,1)) = -log sigma + 0.5*(sigma^2 + mu^2) - 0.5
            kl_theta = jnp.sum(-jnp.log(th_scale)
                               + 0.5 * (th_scale * th_scale + th_loc * th_loc) - 0.5)
            kl_gamma = jnp.sum(-jnp.log(ga_scale)
                               + 0.5 * (ga_scale * ga_scale + ga_loc * ga_loc) - 0.5)
            # per-row (N-invariant) part of kl_z, summed over latent dims
            c_z = jnp.sum(-jnp.log(z_scale) + 0.5 * z_scale * z_scale - 0.5)
            # per-row constant of -log_prob: sum_p log(sigma_p) + 0.5*P*log(2*pi)
            obs_logconst = jnp.sum(jnp.log(obs_scale)) + 0.5 * num_feats * _LOG_2PI
            acc_s[0] = (n_valid * obs_logconst
                        + af * (n_valid * c_z
                                + (kl_theta + kl_gamma) * inv_num_batches))

    # ---- per row-tile: data-dependent part of -elbo ----
    zi = zi_ref[...].astype(jnp.float32)                                   # (TN, L)
    z_i = zi + zscale_s[...] * eps_z_ref[...].astype(jnp.float32)          # q_z rsample
    eta = jax.lax.dot_general(z_i, theta_s[...], (((1,), (0,)), ((), ())),
                              preferred_element_type=jnp.float32)          # (TN, P)
    diff = (x_ref[...].astype(jnp.float32) - eta) * invscale_s[...]        # (TN, P)
    # merge reductions: one (TN,1) row-partial, one small final sum
    row = (0.5 * jnp.sum(diff * diff, axis=1, keepdims=True)
           + (0.5 * af) * jnp.sum(zi * zi, axis=1, keepdims=True))         # (TN, 1)
    acc_s[0] += jnp.sum(row)

    # ---- last row-tile of this core-split: publish partial -elbo ----
    @pl.when(i == pl.num_programs(1) - 1)
    def _finalize():
        out_ref[...] = jnp.full(out_ref.shape, acc_s[0], dtype=out_ref.dtype)


def mf_forward(x, zi_params, z_rho, theta_loc, theta_rho, gamma_loc, gamma_rho,
               eps_z, eps_theta, eps_gamma, annealing_factor, num_batches,
               *, row_tile=2048, core_splits=2):
    """Returns -elbo (scalar float32), matching MatrixFactorizationModel.forward."""
    N, P = x.shape
    L = zi_params.shape[-1]

    # Row tiling: big tiles amortize grid-step overhead, still tiny vs VMEM
    # (even on v7x's 32 MiB scoped default: 3 pipelined inputs * row_tile rows).
    TN = _round_up(min(row_tile, _round_up(N, 8)), 8)
    num_tiles = -(-N // TN)
    C = core_splits if num_tiles >= core_splits else 1
    T = -(-num_tiles // C)                      # row tiles per core-split
    padded_N = C * T * TN

    def pad_rows(a):
        if a.shape[0] == padded_N:
            return a
        return jnp.pad(a, ((0, padded_N - a.shape[0]), (0, 0)))

    x_p = pad_rows(x)
    zi_p = pad_rows(zi_params)
    eps_z_p = pad_rows(eps_z)

    # (L, P) layout so the MXU contraction is (M,K)x(K,N) with no RHS relayout.
    th_loc_t = jnp.transpose(theta_loc)
    th_rho_t = jnp.transpose(theta_rho)
    eps_th_t = jnp.transpose(eps_theta)
    z_rho2 = z_rho.reshape(1, L)
    ga_loc2 = gamma_loc.reshape(1, P)
    ga_rho2 = gamma_rho.reshape(1, P)
    eps_ga2 = eps_gamma.reshape(1, P)

    scalars = jnp.array([annealing_factor, 1.0 / num_batches, float(N)],
                        dtype=jnp.float32)

    row_map = lambda c, i: (c * T + i, 0)
    fixed_map = lambda c, i: (0, 0)

    in_specs = [
        pl.BlockSpec((TN, P), row_map),          # x
        pl.BlockSpec((TN, L), row_map),          # zi_params
        pl.BlockSpec((TN, L), row_map),          # eps_z
        pl.BlockSpec((1, L), fixed_map),         # z_rho
        pl.BlockSpec((L, P), fixed_map),         # theta_loc (transposed)
        pl.BlockSpec((L, P), fixed_map),         # theta_rho (transposed)
        pl.BlockSpec((L, P), fixed_map),         # eps_theta (transposed)
        pl.BlockSpec((1, P), fixed_map),         # gamma_loc
        pl.BlockSpec((1, P), fixed_map),         # gamma_rho
        pl.BlockSpec((1, P), fixed_map),         # eps_gamma
        pl.BlockSpec(memory_space=pltpu.MemorySpace.SMEM),   # [af, 1/nb, N]
    ]
    out_spec = pl.BlockSpec((8, 128), lambda c, i: (c, 0))

    out = pl.pallas_call(
        mf_forward_kernel,
        out_shape=jax.ShapeDtypeStruct((C * 8, 128), jnp.float32),
        grid=(C, T),
        in_specs=in_specs,
        out_specs=out_spec,
        scratch_shapes=[
            pltpu.VMEM((L, P), jnp.float32),     # sampled theta (L, P)
            pltpu.VMEM((1, L), jnp.float32),     # softplus(z_rho)
            pltpu.VMEM((1, P), jnp.float32),     # 1 / obs_scale
            pltpu.SMEM((1,), jnp.float32),       # -elbo accumulator
        ],
        compiler_params=pltpu.CompilerParams(
            dimension_semantics=("parallel", "arbitrary")),
    )(x_p, zi_p, eps_z_p, z_rho2, th_loc_t, th_rho_t, eps_th_t,
      ga_loc2, ga_rho2, eps_ga2, scalars)

    # sum the per-core-split partial -elbo values
    return jnp.sum(out.reshape(C, 8, 128)[:, 0, 0])


def mf_forward_ref(x, zi_params, z_rho, theta_loc, theta_rho, gamma_loc, gamma_rho,
                   eps_z, eps_theta, eps_gamma, annealing_factor, num_batches):
    """Pure-JAX reference (mirrors the PyTorch forward semantics)."""
    sp = jax.nn.softplus
    z_scale, th_scale, ga_scale = sp(z_rho), sp(theta_rho), sp(gamma_rho)
    z_i = zi_params + z_scale[None, :] * eps_z
    theta = theta_loc + th_scale * eps_theta
    gamma = gamma_loc + ga_scale * eps_gamma
    eta = z_i @ theta.T
    obs_scale = 1e-15 + sp(gamma)[None, :]
    diff = (x - eta) / obs_scale
    log_prob = -0.5 * diff * diff - jnp.log(obs_scale) - 0.5 * _LOG_2PI
    re = jnp.sum(log_prob)
    kl = lambda mu, sig: jnp.sum(-jnp.log(sig) + 0.5 * (sig ** 2 + mu ** 2) - 0.5)
    kl_z = kl(zi_params, jnp.broadcast_to(z_scale[None, :], zi_params.shape))
    kl_theta = (kl(theta_loc, th_scale) + kl(gamma_loc, ga_scale)) / num_batches
    elbo = re - annealing_factor * (kl_z + kl_theta)
    return -elbo


if __name__ == "__main__":
    def make_inputs(key, N, L, P):
        ks = jax.random.split(key, 10)
        x = jax.random.normal(ks[0], (N, P), jnp.float32)
        zi_params = 0.1 * jax.random.normal(ks[1], (N, L), jnp.float32)
        z_rho = jax.random.uniform(ks[2], (L,), jnp.float32, -2.0, 1.0)
        theta_loc = 0.1 * jax.random.normal(ks[3], (P, L), jnp.float32)
        theta_rho = jax.random.uniform(ks[4], (P, L), jnp.float32, -3.0, -1.0)
        gamma_loc = 0.1 * jax.random.normal(ks[5], (P,), jnp.float32)
        gamma_rho = jax.random.uniform(ks[6], (P,), jnp.float32, -3.0, -1.0)
        eps_z = jax.random.normal(ks[7], (N, L), jnp.float32)
        eps_theta = jax.random.normal(ks[8], (P, L), jnp.float32)
        eps_gamma = jax.random.normal(ks[9], (P,), jnp.float32)
        return (x, zi_params, z_rho, theta_loc, theta_rho, gamma_loc, gamma_rho,
                eps_z, eps_theta, eps_gamma, 1.0, 10)

    key = jax.random.PRNGKey(0)
    k_small, k_big = jax.random.split(key)

    # Small shapes consistent with the module: batch=8, latent=32, 16 Normal features.
    args_small = make_inputs(k_small, 8, 32, 16)
    neg_elbo = mf_forward(*args_small)
    jax.block_until_ready(neg_elbo)
    ref = mf_forward_ref(*args_small)
    np.testing.assert_allclose(np.asarray(neg_elbo), np.asarray(ref),
                               rtol=1e-4, atol=1e-3)

    # Larger batch: exercises row tiling, zero padding, and the 2-way core split.
    args_big = make_inputs(k_big, 5000, 32, 16)
    neg_elbo_big = mf_forward(*args_big, row_tile=1024)
    jax.block_until_ready(neg_elbo_big)
    ref_big = mf_forward_ref(*args_big)
    np.testing.assert_allclose(np.asarray(neg_elbo_big), np.asarray(ref_big),
                               rtol=5e-4, atol=5e-2)

    print("KERNEL_OK")
</pallas_src>

<mosaic_0001>
module attributes {stable_mosaic.version = 11 : i64} {
  func.func @mf_forward_kernel(%arg0: i32, %arg1: i32, %arg2: memref<8x16xf32, #tpu.memory_space<vmem>>, %arg3: memref<8x32xf32, #tpu.memory_space<vmem>>, %arg4: memref<8x32xf32, #tpu.memory_space<vmem>>, %arg5: memref<1x32xf32, #tpu.memory_space<vmem>>, %arg6: memref<32x16xf32, #tpu.memory_space<vmem>>, %arg7: memref<32x16xf32, #tpu.memory_space<vmem>>, %arg8: memref<32x16xf32, #tpu.memory_space<vmem>>, %arg9: memref<1x16xf32, #tpu.memory_space<vmem>>, %arg10: memref<1x16xf32, #tpu.memory_space<vmem>>, %arg11: memref<1x16xf32, #tpu.memory_space<vmem>>, %arg12: memref<3xf32, #tpu.memory_space<smem>>, %arg13: memref<8x128xf32, #tpu.memory_space<vmem>>, %arg14: memref<32x16xf32, #tpu.memory_space<vmem>>, %arg15: memref<1x32xf32, #tpu.memory_space<vmem>>, %arg16: memref<1x16xf32, #tpu.memory_space<vmem>>, %arg17: memref<1xf32, #tpu.memory_space<smem>>) attributes {dimension_semantics = [#tpu.dimension_semantics<parallel>, #tpu.dimension_semantics<arbitrary>], iteration_bounds = array<i64: 1, 1>, scalar_prefetch = 0 : i64, scratch_operands = 4 : i64, tpu.core_type = #tpu.core_type<tc>, window_params = [{transform_indices = @transform_0, window_bounds = array<i64: 8, 16>}, {transform_indices = @transform_1, window_bounds = array<i64: 8, 32>}, {transform_indices = @transform_2, window_bounds = array<i64: 8, 32>}, {pipeline_mode = #tpu.pipeline_mode<synchronous>, transform_indices = @transform_3, window_bounds = array<i64: 1, 32>}, {pipeline_mode = #tpu.pipeline_mode<synchronous>, transform_indices = @transform_4, window_bounds = array<i64: 32, 16>}, {pipeline_mode = #tpu.pipeline_mode<synchronous>, transform_indices = @transform_5, window_bounds = array<i64: 32, 16>}, {pipeline_mode = #tpu.pipeline_mode<synchronous>, transform_indices = @transform_6, window_bounds = array<i64: 32, 16>}, {pipeline_mode = #tpu.pipeline_mode<synchronous>, transform_indices = @transform_7, window_bounds = array<i64: 1, 16>}, {pipeline_mode = #tpu.pipeline_mode<synchronous>, transform_indices = @transform_8, window_bounds = array<i64: 1, 16>}, {pipeline_mode = #tpu.pipeline_mode<synchronous>, transform_indices = @transform_9, window_bounds = array<i64: 1, 16>}, {transform_indices = @transform_10, window_bounds = array<i64: 3>}, {transform_indices = @transform_11, window_bounds = array<i64: 8, 128>}]} {
    %c0 = arith.constant 0 : index
    %0 = memref.load %arg12[%c0] : memref<3xf32, #tpu.memory_space<smem>>
    %c1 = arith.constant 1 : index
    %1 = memref.load %arg12[%c1] : memref<3xf32, #tpu.memory_space<smem>>
    %c2 = arith.constant 2 : index
    %2 = memref.load %arg12[%c2] : memref<3xf32, #tpu.memory_space<smem>>
    %c0_i32 = arith.constant 0 : i32
    %3 = arith.cmpi eq, %arg1, %c0_i32 : i32
    %4 = arith.extui %3 : i1 to i32
    %c0_i32_0 = arith.constant 0 : i32
    %5 = arith.cmpi ne, %4, %c0_i32_0 : i32
    scf.if %5 {
      %c0_22 = arith.constant 0 : index
      %c0_23 = arith.constant 0 : index
      %41 = vector.load %arg5[%c0_22, %c0_23] : memref<1x32xf32, #tpu.memory_space<vmem>>, vector<1x32xf32>
      %cst_24 = arith.constant 0.000000e+00 : f32
      %42 = vector.broadcast %cst_24 : f32 to vector<1x32xf32>
      %43 = arith.maximumf %41, %42 : vector<1x32xf32>
      %44 = math.absf %41 : vector<1x32xf32>
      %cst_25 = arith.constant 0.000000e+00 : f32
      %45 = vector.broadcast %cst_25 : f32 to vector<1x32xf32>
      %46 = arith.subf %45, %44 : vector<1x32xf32>
      %47 = math.exp %46 : vector<1x32xf32>
      %48 = math.log1p %47 : vector<1x32xf32>
      %49 = arith.addf %43, %48 : vector<1x32xf32>
      %c0_26 = arith.constant 0 : index
      %c0_27 = arith.constant 0 : index
      %50 = vector.load %arg15[%c0_26, %c0_27] : memref<1x32xf32, #tpu.memory_space<vmem>>, vector<1x32xf32>
      tpu.vector_store %arg15[%c0_26, %c0_27], %49 {strides = array<i32>} : memref<1x32xf32, #tpu.memory_space<vmem>>, vector<1x32xf32>,
      %c0_28 = arith.constant 0 : index
      %c0_29 = arith.constant 0 : index
      %51 = vector.load %arg7[%c0_28, %c0_29] : memref<32x16xf32, #tpu.memory_space<vmem>>, vector<32x16xf32>
      %cst_30 = arith.constant 0.000000e+00 : f32
      %52 = vector.broadcast %cst_30 : f32 to vector<32x16xf32>
      %53 = arith.maximumf %51, %52 : vector<32x16xf32>
      %54 = math.absf %51 : vector<32x16xf32>
      %cst_31 = arith.constant 0.000000e+00 : f32
      %55 = vector.broadcast %cst_31 : f32 to vector<32x16xf32>
      %56 = arith.subf %55, %54 : vector<32x16xf32>
      %57 = math.exp %56 : vector<32x16xf32>
      %58 = math.log1p %57 : vector<32x16xf32>
      %59 = arith.addf %53, %58 : vector<32x16xf32>
      %c0_32 = arith.constant 0 : index
      %c0_33 = arith.constant 0 : index
      %60 = vector.load %arg6[%c0_32, %c0_33] : memref<32x16xf32, #tpu.memory_space<vmem>>, vector<32x16xf32>
      %c0_34 = arith.constant 0 : index
      %c0_35 = arith.constant 0 : index
      %61 = vector.load %arg8[%c0_34, %c0_35] : memref<32x16xf32, #tpu.memory_space<vmem>>, vector<32x16xf32>
      %62 = arith.mulf %59, %61 : vector<32x16xf32>
      %63 = arith.addf %60, %62 : vector<32x16xf32>
      %c0_36 = arith.constant 0 : index
      %c0_37 = arith.constant 0 : index
      %64 = vector.load %arg14[%c0_36, %c0_37] : memref<32x16xf32, #tpu.memory_space<vmem>>, vector<32x16xf32>
      tpu.vector_store %arg14[%c0_36, %c0_37], %63 {strides = array<i32>} : memref<32x16xf32, #tpu.memory_space<vmem>>, vector<32x16xf32>,
      %c0_38 = arith.constant 0 : index
      %c0_39 = arith.constant 0 : index
      %65 = vector.load %arg10[%c0_38, %c0_39] : memref<1x16xf32, #tpu.memory_space<vmem>>, vector<1x16xf32>
      %cst_40 = arith.constant 0.000000e+00 : f32
      %66 = vector.broadcast %cst_40 : f32 to vector<1x16xf32>
      %67 = arith.maximumf %65, %66 : vector<1x16xf32>
      %68 = math.absf %65 : vector<1x16xf32>
      %cst_41 = arith.constant 0.000000e+00 : f32
      %69 = vector.broadcast %cst_41 : f32 to vector<1x16xf32>
      %70 = arith.subf %69, %68 : vector<1x16xf32>
      %71 = math.exp %70 : vector<1x16xf32>
      %72 = math.log1p %71 : vector<1x16xf32>
      %73 = arith.addf %67, %72 : vector<1x16xf32>
      %c0_42 = arith.constant 0 : index
      %c0_43 = arith.constant 0 : index
      %74 = vector.load %arg9[%c0_42, %c0_43] : memref<1x16xf32, #tpu.memory_space<vmem>>, vector<1x16xf32>
      %c0_44 = arith.constant 0 : index
      %c0_45 = arith.constant 0 : index
      %75 = vector.load %arg11[%c0_44, %c0_45] : memref<1x16xf32, #tpu.memory_space<vmem>>, vector<1x16xf32>
      %76 = arith.mulf %73, %75 : vector<1x16xf32>
      %77 = arith.addf %74, %76 : vector<1x16xf32>
      %cst_46 = arith.constant 0.000000e+00 : f32
      %78 = vector.broadcast %cst_46 : f32 to vector<1x16xf32>
      %79 = arith.maximumf %77, %78 : vector<1x16xf32>
      %80 = math.absf %77 : vector<1x16xf32>
      %cst_47 = arith.constant 0.000000e+00 : f32
      %81 = vector.broadcast %cst_47 : f32 to vector<1x16xf32>
      %82 = arith.subf %81, %80 : vector<1x16xf32>
      %83 = math.exp %82 : vector<1x16xf32>
      %84 = math.log1p %83 : vector<1x16xf32>
      %85 = arith.addf %79, %84 : vector<1x16xf32>
      %cst_48 = arith.constant 1.000000e-15 : f32
      %86 = vector.broadcast %cst_48 : f32 to vector<1x16xf32>
      %87 = arith.addf %86, %85 : vector<1x16xf32>
      %cst_49 = arith.constant 1.000000e+00 : f32
      %88 = vector.broadcast %cst_49 : f32 to vector<1x16xf32>
      %89 = arith.divf %88, %87 : vector<1x16xf32>
      %c0_50 = arith.constant 0 : index
      %c0_51 = arith.constant 0 : index
      %90 = vector.load %arg16[%c0_50, %c0_51] : memref<1x16xf32, #tpu.memory_space<vmem>>, vector<1x16xf32>
      tpu.vector_store %arg16[%c0_50, %c0_51], %89 {strides = array<i32>} : memref<1x16xf32, #tpu.memory_space<vmem>>, vector<1x16xf32>,
      %cst_52 = arith.constant 0.000000e+00 : f32
      %c0_53 = arith.constant 0 : index
      %91 = memref.load %arg17[%c0_53] : memref<1xf32, #tpu.memory_space<smem>>
      memref.store %cst_52, %arg17[%c0_53] : memref<1xf32, #tpu.memory_space<smem>>
      %c0_i32_54 = arith.constant 0 : i32
      %92 = arith.cmpi eq, %arg0, %c0_i32_54 : i32
      %93 = arith.extui %92 : i1 to i32
      %c0_i32_55 = arith.constant 0 : i32
      %94 = arith.cmpi ne, %93, %c0_i32_55 : i32
      scf.if %94 {
        %c0_56 = arith.constant 0 : index
        %c0_57 = arith.constant 0 : index
        %95 = vector.load %arg6[%c0_56, %c0_57] : memref<32x16xf32, #tpu.memory_space<vmem>>, vector<32x16xf32>
        %c0_58 = arith.constant 0 : index
        %c0_59 = arith.constant 0 : index
        %96 = vector.load %arg9[%c0_58, %c0_59] : memref<1x16xf32, #tpu.memory_space<vmem>>, vector<1x16xf32>
        %97 = math.log %59 : vector<32x16xf32>
        %cst_60 = arith.constant 0.000000e+00 : f32
        %98 = vector.broadcast %cst_60 : f32 to vector<32x16xf32>
        %99 = arith.subf %98, %97 : vector<32x16xf32>
        %100 = arith.mulf %59, %59 : vector<32x16xf32>
        %101 = arith.mulf %95, %95 : vector<32x16xf32>
        %102 = arith.addf %100, %101 : vector<32x16xf32>
        %cst_61 = arith.constant 5.000000e-01 : f32
        %103 = vector.broadcast %cst_61 : f32 to vector<32x16xf32>
        %104 = arith.mulf %103, %102 : vector<32x16xf32>
        %105 = arith.addf %99, %104 : vector<32x16xf32>
        %cst_62 = arith.constant 5.000000e-01 : f32
        %106 = vector.broadcast %cst_62 : f32 to vector<32x16xf32>
        %107 = arith.subf %105, %106 : vector<32x16xf32>
        %108 = vector.shape_cast %107 : vector<32x16xf32> to vector<1x32x16xf32>
        %cst_63 = arith.constant dense<0.000000e+00> : vector<1xf32>
        %109 = vector.multi_reduction <add>, %108, %cst_63 [1, 2] : vector<1x32x16xf32> to vector<1xf32>
        %110 = vector.shape_cast %109 : vector<1xf32> to vector<1x1x1xf32>
        %111 = vector.extract %110[0, 0, 0] : f32 from vector<1x1x1xf32>
        %112 = math.log %73 : vector<1x16xf32>
        %cst_64 = arith.constant 0.000000e+00 : f32
        %113 = vector.broadcast %cst_64 : f32 to vector<1x16xf32>
        %114 = arith.subf %113, %112 : vector<1x16xf32>
        %115 = arith.mulf %73, %73 : vector<1x16xf32>
        %116 = arith.mulf %96, %96 : vector<1x16xf32>
        %117 = arith.addf %115, %116 : vector<1x16xf32>
        %cst_65 = arith.constant 5.000000e-01 : f32
        %118 = vector.broadcast %cst_65 : f32 to vector<1x16xf32>
        %119 = arith.mulf %118, %117 : vector<1x16xf32>
        %120 = arith.addf %114, %119 : vector<1x16xf32>
        %cst_66 = arith.constant 5.000000e-01 : f32
        %121 = vector.broadcast %cst_66 : f32 to vector<1x16xf32>
        %122 = arith.subf %120, %121 : vector<1x16xf32>
        %123 = vector.shape_cast %122 : vector<1x16xf32> to vector<1x1x16xf32>
        %cst_67 = arith.constant dense<0.000000e+00> : vector<1xf32>
        %124 = vector.multi_reduction <add>, %123, %cst_67 [1, 2] : vector<1x1x16xf32> to vector<1xf32>
        %125 = vector.shape_cast %124 : vector<1xf32> to vector<1x1x1xf32>
        %126 = vector.extract %125[0, 0, 0] : f32 from vector<1x1x1xf32>
        %127 = math.log %49 : vector<1x32xf32>
        %cst_68 = arith.constant 0.000000e+00 : f32
        %128 = vector.broadcast %cst_68 : f32 to vector<1x32xf32>
        %129 = arith.subf %128, %127 : vector<1x32xf32>
        %cst_69 = arith.constant 5.000000e-01 : f32
        %130 = vector.broadcast %cst_69 : f32 to vector<1x32xf32>
        %131 = arith.mulf %130, %49 : vector<1x32xf32>
        %132 = arith.mulf %131, %49 : vector<1x32xf32>
        %133 = arith.addf %129, %132 : vector<1x32xf32>
        %cst_70 = arith.constant 5.000000e-01 : f32
        %134 = vector.broadcast %cst_70 : f32 to vector<1x32xf32>
        %135 = arith.subf %133, %134 : vector<1x32xf32>
        %136 = vector.shape_cast %135 : vector<1x32xf32> to vector<1x1x32xf32>
        %cst_71 = arith.constant dense<0.000000e+00> : vector<1xf32>
        %137 = vector.multi_reduction <add>, %136, %cst_71 [1, 2] : vector<1x1x32xf32> to vector<1xf32>
        %138 = vector.shape_cast %137 : vector<1xf32> to vector<1x1x1xf32>
        %139 = vector.extract %138[0, 0, 0] : f32 from vector<1x1x1xf32>
        %140 = math.log %87 : vector<1x16xf32>
        %141 = vector.shape_cast %140 : vector<1x16xf32> to vector<1x1x16xf32>
        %cst_72 = arith.constant dense<0.000000e+00> : vector<1xf32>
        %142 = vector.multi_reduction <add>, %141, %cst_72 [1, 2] : vector<1x1x16xf32> to vector<1xf32>
        %143 = vector.shape_cast %142 : vector<1xf32> to vector<1x1x1xf32>
        %144 = vector.extract %143[0, 0, 0] : f32 from vector<1x1x1xf32>
        %cst_73 = arith.constant 14.7030163 : f32
        %145 = arith.addf %144, %cst_73 : f32
        %146 = arith.mulf %2, %145 : f32
        %147 = arith.mulf %2, %139 : f32
        %148 = arith.addf %111, %126 : f32
        %149 = arith.mulf %148, %1 : f32
        %150 = arith.addf %147, %149 : f32
        %151 = arith.mulf %0, %150 : f32
        %152 = arith.addf %146, %151 : f32
        %c0_74 = arith.constant 0 : index
        %153 = memref.load %arg17[%c0_74] : memref<1xf32, #tpu.memory_space<smem>>
        memref.store %152, %arg17[%c0_74] : memref<1xf32, #tpu.memory_space<smem>>
      } else {
      }
    } else {
    }
    %c0_1 = arith.constant 0 : index
    %c0_2 = arith.constant 0 : index
    %6 = vector.load %arg3[%c0_1, %c0_2] : memref<8x32xf32, #tpu.memory_space<vmem>>, vector<8x32xf32>
    %c0_3 = arith.constant 0 : index
    %c0_4 = arith.constant 0 : index
    %7 = vector.load %arg15[%c0_3, %c0_4] : memref<1x32xf32, #tpu.memory_space<vmem>>, vector<1x32xf32>
    %c0_5 = arith.constant 0 : index
    %c0_6 = arith.constant 0 : index
    %8 = vector.load %arg4[%c0_5, %c0_6] : memref<8x32xf32, #tpu.memory_space<vmem>>, vector<8x32xf32>
    %9 = vector.broadcast %7 : vector<1x32xf32> to vector<8x32xf32>
    %10 = arith.mulf %9, %8 : vector<8x32xf32>
    %11 = arith.addf %6, %10 : vector<8x32xf32>
    %c0_7 = arith.constant 0 : index
    %c0_8 = arith.constant 0 : index
    %12 = vector.load %arg14[%c0_7, %c0_8] : memref<32x16xf32, #tpu.memory_space<vmem>>, vector<32x16xf32>
    %cst = arith.constant dense<0.000000e+00> : vector<8x16xf32>
    %13 = tpu.matmul %11, %12, %cst {dimension_numbers = #tpu.dot_dimension_numbers<[1], [0], [0], [1], [0, 0, 1, 1], [], []>} : vector<8x32xf32>, vector<32x16xf32>, vector<8x16xf32> -> vector<8x16xf32>
    %c0_9 = arith.constant 0 : index
    %c0_10 = arith.constant 0 : index
    %14 = vector.load %arg2[%c0_9, %c0_10] : memref<8x16xf32, #tpu.memory_space<vmem>>, vector<8x16xf32>
    %15 = arith.subf %14, %13 : vector<8x16xf32>
    %c0_11 = arith.constant 0 : index
    %c0_12 = arith.constant 0 : index
    %16 = vector.load %arg16[%c0_11, %c0_12] : memref<1x16xf32, #tpu.memory_space<vmem>>, vector<1x16xf32>
    %17 = vector.broadcast %16 : vector<1x16xf32> to vector<8x16xf32>
    %18 = arith.mulf %15, %17 : vector<8x16xf32>
    %19 = arith.mulf %18, %18 : vector<8x16xf32>
    %cst_13 = arith.constant dense<0.000000e+00> : vector<8xf32>
    %20 = vector.multi_reduction <add>, %19, %cst_13 [1] : vector<8x16xf32> to vector<8xf32>
    %21 = vector.shape_cast %20 : vector<8xf32> to vector<8x1xf32>
    %cst_14 = arith.constant 5.000000e-01 : f32
    %22 = vector.broadcast %cst_14 : f32 to vector<8x1xf32>
    %23 = arith.mulf %22, %21 : vector<8x1xf32>
    %cst_15 = arith.constant 5.000000e-01 : f32
    %24 = arith.mulf %cst_15, %0 : f32
    %25 = arith.mulf %6, %6 : vector<8x32xf32>
    %cst_16 = arith.constant dense<0.000000e+00> : vector<8xf32>
    %26 = vector.multi_reduction <add>, %25, %cst_16 [1] : vector<8x32xf32> to vector<8xf32>
    %27 = vector.shape_cast %26 : vector<8xf32> to vector<8x1xf32>
    %28 = vector.broadcast %24 : f32 to vector<8x1xf32>
    %29 = arith.mulf %28, %27 : vector<8x1xf32>
    %30 = arith.addf %23, %29 : vector<8x1xf32>
    %c0_17 = arith.constant 0 : index
    %31 = memref.load %arg17[%c0_17] : memref<1xf32, #tpu.memory_space<smem>>
    %32 = vector.shape_cast %30 : vector<8x1xf32> to vector<1x8x1xf32>
    %cst_18 = arith.constant dense<0.000000e+00> : vector<1xf32>
    %33 = vector.multi_reduction <add>, %32, %cst_18 [1, 2] : vector<1x8x1xf32> to vector<1xf32>
    %34 = vector.shape_cast %33 : vector<1xf32> to vector<1x1x1xf32>
    %35 = vector.extract %34[0, 0, 0] : f32 from vector<1x1x1xf32>
    %36 = arith.addf %31, %35 : f32
    %c0_19 = arith.constant 0 : index
    %37 = memref.load %arg17[%c0_19] : memref<1xf32, #tpu.memory_space<smem>>
    memref.store %36, %arg17[%c0_19] : memref<1xf32, #tpu.memory_space<smem>>
    %c0_i32_20 = arith.constant 0 : i32
    %38 = arith.cmpi eq, %arg1, %c0_i32_20 : i32
    %39 = arith.extui %38 : i1 to i32
    %c0_i32_21 = arith.constant 0 : i32
    %40 = arith.cmpi ne, %39, %c0_i32_21 : i32
    scf.if %40 {
      %c0_22 = arith.constant 0 : index
      %41 = memref.load %arg17[%c0_22] : memref<1xf32, #tpu.memory_space<smem>>
      %42 = vector.broadcast %41 : f32 to vector<8x128xf32>
      %c0_23 = arith.constant 0 : index
      %c0_24 = arith.constant 0 : index
      %43 = vector.load %arg13[%c0_23, %c0_24] : memref<8x128xf32, #tpu.memory_space<vmem>>, vector<8x128xf32>
      tpu.vector_store %arg13[%c0_23, %c0_24], %42 {strides = array<i32>} : memref<8x128xf32, #tpu.memory_space<vmem>>, vector<8x128xf32>,
    } else {
    }
    return
  }
  func.func @transform_0(%arg0: i32, %arg1: i32) -> (i32, i32) {
    %c1_i32 = arith.constant 1 : i32
    %0 = arith.muli %arg0, %c1_i32 : i32
    %1 = arith.addi %0, %arg1 : i32
    %c0_i32 = arith.constant 0 : i32
    %c0_i32_0 = arith.constant 0 : i32
    return %1, %c0_i32 : i32, i32
  }
  func.func @transform_1(%arg0: i32, %arg1: i32) -> (i32, i32) {
    %c1_i32 = arith.constant 1 : i32
    %0 = arith.muli %arg0, %c1_i32 : i32
    %1 = arith.addi %0, %arg1 : i32
    %c0_i32 = arith.constant 0 : i32
    %c0_i32_0 = arith.constant 0 : i32
    return %1, %c0_i32 : i32, i32
  }
  func.func @transform_2(%arg0: i32, %arg1: i32) -> (i32, i32) {
    %c1_i32 = arith.constant 1 : i32
    %0 = arith.muli %arg0, %c1_i32 : i32
    %1 = arith.addi %0, %arg1 : i32
    %c0_i32 = arith.constant 0 : i32
    %c0_i32_0 = arith.constant 0 : i32
    return %1, %c0_i32 : i32, i32
  }
  func.func @transform_3(%arg0: i32, %arg1: i32) -> (i32, i32) {
    %c0_i32 = arith.constant 0 : i32
    %c0_i32_0 = arith.constant 0 : i32
    %c0_i32_1 = arith.constant 0 : i32
    return %c0_i32, %c0_i32_0 : i32, i32
  }
  func.func @transform_4(%arg0: i32, %arg1: i32) -> (i32, i32) {
    %c0_i32 = arith.constant 0 : i32
    %c0_i32_0 = arith.constant 0 : i32
    %c0_i32_1 = arith.constant 0 : i32
    return %c0_i32, %c0_i32_0 : i32, i32
  }
  func.func @transform_5(%arg0: i32, %arg1: i32) -> (i32, i32) {
    %c0_i32 = arith.constant 0 : i32
    %c0_i32_0 = arith.constant 0 : i32
    %c0_i32_1 = arith.constant 0 : i32
    return %c0_i32, %c0_i32_0 : i32, i32
  }
  func.func @transform_6(%arg0: i32, %arg1: i32) -> (i32, i32) {
    %c0_i32 = arith.constant 0 : i32
    %c0_i32_0 = arith.constant 0 : i32
    %c0_i32_1 = arith.constant 0 : i32
    return %c0_i32, %c0_i32_0 : i32, i32
  }
  func.func @transform_7(%arg0: i32, %arg1: i32) -> (i32, i32) {
    %c0_i32 = arith.constant 0 : i32
    %c0_i32_0 = arith.constant 0 : i32
    %c0_i32_1 = arith.constant 0 : i32
    return %c0_i32, %c0_i32_0 : i32, i32
  }
  func.func @transform_8(%arg0: i32, %arg1: i32) -> (i32, i32) {
    %c0_i32 = arith.constant 0 : i32
    %c0_i32_0 = arith.constant 0 : i32
    %c0_i32_1 = arith.constant 0 : i32
    return %c0_i32, %c0_i32_0 : i32, i32
  }
  func.func @transform_9(%arg0: i32, %arg1: i32) -> (i32, i32) {
    %c0_i32 = arith.constant 0 : i32
    %c0_i32_0 = arith.constant 0 : i32
    %c0_i32_1 = arith.constant 0 : i32
    return %c0_i32, %c0_i32_0 : i32, i32
  }
  func.func @transform_10(%arg0: i32, %arg1: i32) -> i32 {
    %c0_i32 = arith.constant 0 : i32
    %c0_i32_0 = arith.constant 0 : i32
    return %c0_i32 : i32
  }
  func.func @transform_11(%arg0: i32, %arg1: i32) -> (i32, i32) {
    %c0_i32 = arith.constant 0 : i32
    %c0_i32_0 = arith.constant 0 : i32
    return %arg0, %c0_i32 : i32, i32
  }
}

</mosaic_0001>

<llo_original>
// kernel: tpu_custom_call.1
$region0: #{tpu_custom_call.1}
  #allocation0 [shape = 'u32[]', space=smem, size = 0x4, offset = 0x4, fixed_abs, tag = 'smem constant byte address 0x4 - core index']
  #allocation1 [shape = 'u32[144,128]{1,0:T(1,128)}', space=vmem, size = 0x12000, scoped, tag = 'internal scratch']
  #allocation2 [shape = 'f32[32,16]{1,0:T(8,128)}', space=vmem, size = 0x4000, scoped, tag = 'scratch operand']
  #allocation3 [shape = 'f32[1,32]{1,0:T(1,128)}', space=vmem, size = 0x200, scoped, tag = 'scratch operand']
  #allocation4 [shape = 'f32[1,16]{1,0:T(1,128)}', space=vmem, size = 0x200, scoped, tag = 'scratch operand']
  #allocation5 [shape = 'f32[1]{0:T(128)}', space=smem, size = 0x200, scoped, tag = 'scratch operand']
  %s0 = inlined_call_operand.vmem [shape: f32[8,16], index: 0, kind: input, shape index: {}]
  %s1 = inlined_call_operand.vmem [shape: f32[8,32], index: 1, kind: input, shape index: {}]
  %s2 = inlined_call_operand.vmem [shape: f32[8,32], index: 2, kind: input, shape index: {}]
  %s3 = inlined_call_operand.vmem [shape: f32[1,32], index: 3, kind: input, shape index: {}]
  %s4 = inlined_call_operand.vmem [shape: f32[32,16], index: 4, kind: input, shape index: {}]
  %s5 = inlined_call_operand.vmem [shape: f32[32,16], index: 5, kind: input, shape index: {}]
  %s6 = inlined_call_operand.vmem [shape: f32[32,16], index: 6, kind: input, shape index: {}]
  %s7 = inlined_call_operand.vmem [shape: f32[1,16], index: 7, kind: input, shape index: {}]
  %s8 = inlined_call_operand.vmem [shape: f32[1,16], index: 8, kind: input, shape index: {}]
  %s9 = inlined_call_operand.vmem [shape: f32[1,16], index: 9, kind: input, shape index: {}]
  %s10 = inlined_call_operand.vmem [shape: f32[3], index: 10, kind: input, shape index: {}]
  %s11 = inlined_call_operand.hbm [shape: f32[8,128], index: 11, kind: output, shape index: {}]
  %s12 = sld [smem:[#allocation0]]
  $region70: #{tpu_custom_call.1} parent=0
    _
  %s14 = ssub.s32 1, %s12
  %s15 = scalar_select 0, %s14, %s12
  $region1: #{tpu_custom_call.1} parent=0
    #allocation6 [shape = 'u8[512]{0}', space=smem, size = 0x200, scoped, tag = 'input window, operand 10, single buffered']
    #allocation7 [shape = 's32[1]{0}', space=sflag, size = 0x4, scoped, tag = 'scoped memory for tpu_custom_call.1']
    #allocation8 [shape = 's32[1]{0}', space=sflag, size = 0x4, scoped, tag = 'scoped memory for tpu_custom_call.1']
    #allocation9 [shape = 'u8[4096]{0}', space=vmem, size = 0x1000, scoped, tag = 'output window, operand 0, single buffered']
    %16 = vsyncpa [#allocation8], 0
    %17 = vsyncpa [#allocation7], 0
    // Predicated region
    $region2: #{tpu_custom_call.1} parent=1 // pred_check
      _
    $region3: #{tpu_custom_call.1} parent=1 // pred_check_branch
      %19 = sbr.rel (0) target = $region5
    $region4: #{tpu_custom_call.1} parent=1 // pred_region
      %s20 = sadd.s32 0, 0
      %p21 = scmp.lt.s32.totalorder %s20, 0
      %s22 = scalar_select %p21, %s20, 0
      %s23 = smul.addr %s22, 8
      %s24 = scalar_lea.vmem %s0, %s23
      %s25 = sadd.s32 0, 0
    $region5: #{tpu_custom_call.1} parent=1 // pred_fallthru
      _
    // Predicated region
    $region6: #{tpu_custom_call.1} parent=1 // pred_check
      _
    $region7: #{tpu_custom_call.1} parent=1 // pred_check_branch
      %27 = sbr.rel (0) target = $region9
    $region8: #{tpu_custom_call.1} parent=1 // pred_region
      %s28 = sadd.s32 0, 0
      %p29 = scmp.lt.s32.totalorder %s28, 0
      %s30 = scalar_select %p29, %s28, 0
      %s31 = smul.addr %s30, 8
      %s32 = scalar_lea.vmem %s1, %s31
      %s33 = sadd.s32 0, 0
    $region9: #{tpu_custom_call.1} parent=1 // pred_fallthru
      _
    // Predicated region
    $region10: #{tpu_custom_call.1} parent=1 // pred_check
      _
    $region11: #{tpu_custom_call.1} parent=1 // pred_check_branch
      %35 = sbr.rel (0) target = $region13
    $region12: #{tpu_custom_call.1} parent=1 // pred_region
      %s36 = sadd.s32 0, 0
      %p37 = scmp.lt.s32.totalorder %s36, 0
      %s38 = scalar_select %p37, %s36, 0
      %s39 = smul.addr %s38, 8
      %s40 = scalar_lea.vmem %s2, %s39
      %s41 = sadd.s32 0, 0
    $region13: #{tpu_custom_call.1} parent=1 // pred_fallthru
      _
    // Predicated region
    $region14: #{tpu_custom_call.1} parent=1 // pred_check
      _
    $region15: #{tpu_custom_call.1} parent=1 // pred_check_branch
      %43 = sbr.rel (0) target = $region17
    $region16: #{tpu_custom_call.1} parent=1 // pred_region
      _
    $region17: #{tpu_custom_call.1} parent=1 // pred_fallthru
      _
    // Predicated region
    $region18: #{tpu_custom_call.1} parent=1 // pred_check
      _
    $region19: #{tpu_custom_call.1} parent=1 // pred_check_branch
      %45 = sbr.rel (0) target = $region21
    $region20: #{tpu_custom_call.1} parent=1 // pred_region
      _
    $region21: #{tpu_custom_call.1} parent=1 // pred_fallthru
      _
    // Predicated region
    $region22: #{tpu_custom_call.1} parent=1 // pred_check
      _
    $region23: #{tpu_custom_call.1} parent=1 // pred_check_branch
      %47 = sbr.rel (0) target = $region25
    $region24: #{tpu_custom_call.1} parent=1 // pred_region
      _
    $region25: #{tpu_custom_call.1} parent=1 // pred_fallthru
      _
    // Predicated region
    $region26: #{tpu_custom_call.1} parent=1 // pred_check
      _
    $region27: #{tpu_custom_call.1} parent=1 // pred_check_branch
      %49 = sbr.rel (0) target = $region29
    $region28: #{tpu_custom_call.1} parent=1 // pred_region
      _
    $region29: #{tpu_custom_call.1} parent=1 // pred_fallthru
      _
    // Predicated region
    $region30: #{tpu_custom_call.1} parent=1 // pred_check
      _
    $region31: #{tpu_custom_call.1} parent=1 // pred_check_branch
      %51 = sbr.rel (0) target = $region33
    $region32: #{tpu_custom_call.1} parent=1 // pred_region
      _
    $region33: #{tpu_custom_call.1} parent=1 // pred_fallthru
      _
    // Predicated region
    $region34: #{tpu_custom_call.1} parent=1 // pred_check
      _
    $region35: #{tpu_custom_call.1} parent=1 // pred_check_branch
      %53 = sbr.rel (0) target = $region37
    $region36: #{tpu_custom_call.1} parent=1 // pred_region
      _
    $region37: #{tpu_custom_call.1} parent=1 // pred_fallthru
      _
    // Predicated region
    $region38: #{tpu_custom_call.1} parent=1 // pred_check
      _
    $region39: #{tpu_custom_call.1} parent=1 // pred_check_branch
      %55 = sbr.rel (0) target = $region41
    $region40: #{tpu_custom_call.1} parent=1 // pred_region
      _
    $region41: #{tpu_custom_call.1} parent=1 // pred_fallthru
      _
    // Predicated region
    $region42: #{tpu_custom_call.1} parent=1 // pred_check
      _
    $region43: #{tpu_custom_call.1} parent=1 // pred_check_branch
      %57 = sbr.rel (0) target = $region45
    $region44: #{tpu_custom_call.1} parent=1 // pred_region
      %s59 = ssub.s32 16, 16
      %60 = vsyncadd [#allocation8], %s59
      %s62 = sshll.u32 %s10, 4
      %s63 = int_to_ptr.vmem [resolvable:$true] %s62
      %65 = dma.vmem_to_smem %s63, 16, [#allocation6], [#allocation8]
    $region45: #{tpu_custom_call.1} parent=1 // pred_fallthru
      _
    // Predicated region
    $region46: #{tpu_custom_call.1} parent=1 // pred_check
      _
    $region47: #{tpu_custom_call.1} parent=1 // pred_check_branch
      %67 = sbr.rel (0) target = $region49
    $region48: #{tpu_custom_call.1} parent=1 // pred_region
      %68 = dma.done [#allocation8], 16
    $region49: #{tpu_custom_call.1} parent=1 // pred_fallthru
      _
    %69 = sfence
    %s70 = sadd.s32 0, 0
    %p71 = scmp.lt.s32.totalorder %s70, 0
    %s72 = scalar_select %p71, %s70, 0
    %s73 = smul.addr %s72, 8
    %s74 = scalar_lea.vmem %s0, %s73
    %s75 = sadd.s32 0, 0
    %p76 = scmp.lt.s32.totalorder %s75, 0
    %s77 = scalar_select %p76, %s75, 0
    %s78 = smul.addr %s77, 8
    %s79 = scalar_lea.vmem %s1, %s78
    %s80 = sadd.s32 0, 0
    %p81 = scmp.lt.s32.totalorder %s80, 0
    %s82 = scalar_select %p81, %s80, 0
    %s83 = smul.addr %s82, 8
    %s84 = scalar_lea.vmem %s2, %s83
    %s85 = sadd.s32 0, 0
    %p86 = scmp.lt.s32.totalorder %s85, 0
    %s87 = scalar_select %p86, %s85, 0
    %s88 = smul.addr %s87, 8
    %s89 = scalar_lea.vmem %s0, %s88
    %s90 = sadd.s32 0, 0
    %s91 = sadd.s32 0, 0
    %p92 = scmp.lt.s32.totalorder %s91, 0
    %s93 = scalar_select %p92, %s91, 0
    %s94 = smul.addr %s93, 8
    %s95 = scalar_lea.vmem %s1, %s94
    %s96 = sadd.s32 0, 0
    %s97 = sadd.s32 0, 0
    %p98 = scmp.lt.s32.totalorder %s97, 0
    %s99 = scalar_select %p98, %s97, 0
    %s100 = smul.addr %s99, 8
    %s101 = scalar_lea.vmem %s2, %s100
    %s102 = sadd.s32 0, 0
    %s103 = sld [smem:[#allocation6]]
    %s104 = sld [smem:[#allocation6 + $0x1]]
    %s105 = sld [smem:[#allocation6 + $0x2]]
    %p106 = scmp.eq.s32.totalorder 0, 0
    // Predicated region
    $region50: #{tpu_custom_call.1} parent=1 // pred_check
      %p107 = pneg %p106
    $region51: #{tpu_custom_call.1} parent=1 // pred_check_branch
      %109 = sbr.rel (%p107) target = $region53
    $region52: #{tpu_custom_call.1} parent=1 // pred_region
      %v110 = vld [vmem:[%s3] sm:$0x1]
      %v111 = vmax.f32 %v110, 0.0
      %v112 = vand.u32 2147483647, %v110
      %v113 = vsub.f32 0.0, %v112
      %v114 = vmul.f32 %v113, 1.442695
      %v115 = vpow.pop %v114
      %v116 = vadd.f32 %v115, 1.0
      %v117 = vlog2.pop %v116
      %v118 = vmul.f32 %v117, 0.6931472
      %v119 = vmul.f32 -0.5, %v115
      %v120 = vadd.f32 %v119, 1.0
      %v121 = vmul.f32 %v120, %v115
      %v122 = vand.u32 2147483647, %v115
      %vm123 = vcmp.lt.f32.partialorder %v122, 0.0004427343
      %v124 = vsel %vm123, %v121, %v118
      %v125 = vadd.f32 %v111, %v124
      %vm126 = vcmask 253952
      %127 = vst.msk [vmem:[#allocation3] sm:$0x1] %vm126, %v125
      %v128 = vld [vmem:[%s5] sm:$0xff]
      %v129 = vld [vmem:[%s5 + $0x8] sm:$0xff]
      %v130 = vld [vmem:[%s5 + $0x10] sm:$0xff]
      %v131 = vld [vmem:[%s5 + $0x18] sm:$0xff]
      %v132 = vmax.f32 %v128, 0.0
      %v133 = vmax.f32 %v129, 0.0
      %v134 = vmax.f32 %v130, 0.0
      %v135 = vmax.f32 %v131, 0.0
      %v136 = vand.u32 2147483647, %v128
      %v137 = vand.u32 2147483647, %v129
      %v138 = vand.u32 2147483647, %v130
      %v139 = vand.u32 2147483647, %v131
      %v140 = vsub.f32 0.0, %v136
      %v141 = vsub.f32 0.0, %v137
      %v142 = vsub.f32 0.0, %v138
      %v143 = vsub.f32 0.0, %v139
      %v144 = vmul.f32 %v140, 1.442695
      %v145 = vpow.pop %v144
      %v146 = vmul.f32 %v141, 1.442695
      %v147 = vpow.pop %v146
      %v148 = vmul.f32 %v142, 1.442695
      %v149 = vpow.pop %v148
      %v150 = vmul.f32 %v143, 1.442695
      %v151 = vpow.pop %v150
      %v152 = vadd.f32 %v145, 1.0
      %v153 = vlog2.pop %v152
      %v154 = vmul.f32 %v153, 0.6931472
      %v155 = vmul.f32 -0.5, %v145
      %v156 = vadd.f32 %v155, 1.0
      %v157 = vmul.f32 %v156, %v145
      %v158 = vand.u32 2147483647, %v145
      %vm159 = vcmp.lt.f32.partialorder %v158, 0.0004427343
      %v160 = vsel %vm159, %v157, %v154
      %v161 = vadd.f32 %v147, 1.0
      %v162 = vlog2.pop %v161
      %v163 = vmul.f32 %v162, 0.6931472
      %v164 = vmul.f32 -0.5, %v147
      %v165 = vadd.f32 %v164, 1.0
      %v166 = vmul.f32 %v165, %v147
      %v167 = vand.u32 2147483647, %v147
      %vm168 = vcmp.lt.f32.partialorder %v167, 0.0004427343
      %v169 = vsel %vm168, %v166, %v163
      %v170 = vadd.f32 %v149, 1.0
      %v171 = vlog2.pop %v170
      %v172 = vmul.f32 %v171, 0.6931472
      %v173 = vmul.f32 -0.5, %v149
      %v174 = vadd.f32 %v173, 1.0
      %v175 = vmul.f32 %v174, %v149
      %v176 = vand.u32 2147483647, %v149
      %vm177 = vcmp.lt.f32.partialorder %v176, 0.0004427343
      %v178 = vsel %vm177, %v175, %v172
      %v179 = vadd.f32 %v151, 1.0
      %v180 = vlog2.pop %v179
      %v181 = vmul.f32 %v180, 0.6931472
      %v182 = vmul.f32 -0.5, %v151
      %v183 = vadd.f32 %v182, 1.0
      %v184 = vmul.f32 %v183, %v151
      %v185 = vand.u32 2147483647, %v151
      %vm186 = vcmp.lt.f32.partialorder %v185, 0.0004427343
      %v187 = vsel %vm186, %v184, %v181
      %v188 = vadd.f32 %v132, %v160
      %v189 = vadd.f32 %v133, %v169
      %v190 = vadd.f32 %v134, %v178
      %v191 = vadd.f32 %v135, %v187
      %v192 = vld [vmem:[%s4] sm:$0xff]
      %v193 = vld [vmem:[%s4 + $0x8] sm:$0xff]
      %v194 = vld [vmem:[%s4 + $0x10] sm:$0xff]
      %v195 = vld [vmem:[%s4 + $0x18] sm:$0xff]
      %v196 = vld [vmem:[%s6] sm:$0xff]
      %v197 = vld [vmem:[%s6 + $0x8] sm:$0xff]
      %v198 = vld [vmem:[%s6 + $0x10] sm:$0xff]
      %v199 = vld [vmem:[%s6 + $0x18] sm:$0xff]
      %v200 = vmul.f32 %v188, %v196
      %v201 = vmul.f32 %v189, %v197
      %v202 = vmul.f32 %v190, %v198
      %v203 = vmul.f32 %v191, %v199
      %v204 = vadd.f32 %v192, %v200
      %v205 = vadd.f32 %v193, %v201
      %v206 = vadd.f32 %v194, %v202
      %v207 = vadd.f32 %v195, %v203
      %vm208 = vcmask 130048
      %209 = vst.msk [vmem:[#allocation2] sm:$0xff] %vm208, %v204
      %210 = vst.msk [vmem:[#allocation2 + $0x8] sm:$0xff] %vm208, %v205
      %211 = vst.msk [vmem:[#allocation2 + $0x10] sm:$0xff] %vm208, %v206
      %212 = vst.msk [vmem:[#allocation2 + $0x18] sm:$0xff] %vm208, %v207
      %v213 = vld [vmem:[%s8] sm:$0x1]
      %v214 = vmax.f32 %v213, 0.0
      %v215 = vand.u32 2147483647, %v213
      %v216 = vsub.f32 0.0, %v215
      %v217 = vmul.f32 %v216, 1.442695
      %v218 = vpow.pop %v217
      %v219 = vadd.f32 %v218, 1.0
      %v220 = vlog2.pop %v219
      %v221 = vmul.f32 %v220, 0.6931472
      %v222 = vmul.f32 -0.5, %v218
      %v223 = vadd.f32 %v222, 1.0
      %v224 = vmul.f32 %v223, %v218
      %v225 = vand.u32 2147483647, %v218
      %vm226 = vcmp.lt.f32.partialorder %v225, 0.0004427343
      %v227 = vsel %vm226, %v224, %v221
      %v228 = vadd.f32 %v214, %v227
      %v229 = vld [vmem:[%s7] sm:$0x1]
      %v230 = vld [vmem:[%s9] sm:$0x1]
      %v231 = vmul.f32 %v228, %v230
      %v232 = vadd.f32 %v229, %v231
      %v233 = vmax.f32 %v232, 0.0
      %v234 = vand.u32 2147483647, %v232
      %v235 = vsub.f32 0.0, %v234
      %v236 = vmul.f32 %v235, 1.442695
      %v237 = vpow.pop %v236
      %v238 = vadd.f32 %v237, 1.0
      %v239 = vlog2.pop %v238
      %v240 = vmul.f32 %v239, 0.6931472
      %v241 = vmul.f32 -0.5, %v237
      %v242 = vadd.f32 %v241, 1.0
      %v243 = vmul.f32 %v242, %v237
      %v244 = vand.u32 2147483647, %v237
      %vm245 = vcmp.lt.f32.partialorder %v244, 0.0004427343
      %v246 = vsel %vm245, %v243, %v240
      %v247 = vadd.f32 %v233, %v246
      %v248 = vadd.f32 %v247, 1e-15
      %v249 = vrcp.pop %v248
      %v250 = vmul.f32 1.0, %v249
      %vm251 = vcmask 122880
      %252 = vst.msk [vmem:[#allocation4] sm:$0x1] %vm251, %v250
      %s253 = scalar_lea.smem [#allocation5], 0
      %254 = sst [smem:[%s253]] 0.0
      %p255 = scmp.eq.s32.totalorder 0, 0
      // Predicated region
      $region54: #{tpu_custom_call.1} parent=52 // pred_check
        %p256 = pneg %p255
      $region55: #{tpu_custom_call.1} parent=52 // pred_check_branch
        %258 = sbr.rel (%p256) target = $region57
      $region56: #{tpu_custom_call.1} parent=52 // pred_region
        %v259 = vld [vmem:[%s4] sm:$0xff]
        %v260 = vld [vmem:[%s4 + $0x8] sm:$0xff]
        %v261 = vld [vmem:[%s4 + $0x10] sm:$0xff]
        %v262 = vld [vmem:[%s4 + $0x18] sm:$0xff]
        %v263 = vld [vmem:[%s7] sm:$0x1]
        %v264 = vlog2.pop %v188
        %v265 = vmul.f32 %v264, 0.6931472
        %v266 = vlog2.pop %v189
        %v267 = vmul.f32 %v266, 0.6931472
        %v268 = vlog2.pop %v190
        %v269 = vmul.f32 %v268, 0.6931472
        %v270 = vlog2.pop %v191
        %v271 = vmul.f32 %v270, 0.6931472
        %v272 = vsub.f32 0.0, %v265
        %v273 = vsub.f32 0.0, %v267
        %v274 = vsub.f32 0.0, %v269
        %v275 = vsub.f32 0.0, %v271
        %v276 = vmul.f32 %v188, %v188
        %v277 = vmul.f32 %v189, %v189
        %v278 = vmul.f32 %v190, %v190
        %v279 = vmul.f32 %v191, %v191
        %v280 = vmul.f32 %v259, %v259
        %v281 = vmul.f32 %v260, %v260
        %v282 = vmul.f32 %v261, %v261
        %v283 = vmul.f32 %v262, %v262
        %v284 = vadd.f32 %v276, %v280
        %v285 = vadd.f32 %v277, %v281
        %v286 = vadd.f32 %v278, %v282
        %v287 = vadd.f32 %v279, %v283
        %v288 = vmul.f32 %v284, 0.5
        %v289 = vmul.f32 %v285, 0.5
        %v290 = vmul.f32 %v286, 0.5
        %v291 = vmul.f32 %v287, 0.5
        %v292 = vadd.f32 %v272, %v288
        %v293 = vadd.f32 %v273, %v289
        %v294 = vadd.f32 %v274, %v290
        %v295 = vadd.f32 %v275, %v291
        %v296 = vsub.f32 %v292, 0.5
        %v297 = vsub.f32 %v293, 0.5
        %v298 = vsub.f32 %v294, 0.5
        %v299 = vsub.f32 %v295, 0.5
        %v300 = vsel %vm208, %v296, 0.0
        %v301 = vsel %vm208, %v297, 0.0
        %v302 = vadd.f32 %v300, %v301
        %v303 = vsel %vm208, %v298, 0.0
        %v304 = vadd.f32 %v302, %v303
        %v305 = vsel %vm208, %v299, 0.0
        %v306 = vadd.f32 %v304, %v305
        %307 = vadd.xlane.f32.xlu0 %v306
        %v308 = vpop.xlane.xlu0 %307
        %v309 = vrot.slane %v308, 4
        %v310 = vadd.f32 %v308, %v309
        %v311 = vrot.slane %v310, 2
        %v312 = vadd.f32 %v310, %v311
        %v313 = vrot.slane %v312, 1
        %v314 = vadd.f32 %v312, %v313
        %s315 = vtos %v314
        %v316 = vlog2.pop %v228
        %v317 = vmul.f32 %v316, 0.6931472
        %v318 = vsub.f32 0.0, %v317
        %v319 = vmul.f32 %v228, %v228
        %v320 = vmul.f32 %v263, %v263
        %v321 = vadd.f32 %v319, %v320
        %v322 = vmul.f32 %v321, 0.5
        %v323 = vadd.f32 %v318, %v322
        %v324 = vsub.f32 %v323, 0.5
        %v325 = vsel %vm251, %v324, 0.0
        %326 = vadd.xlane.f32.xlu0 %v325
        %v327 = vpop.xlane.xlu0 %326
        %v328 = vrot.slane %v327, 4
        %v329 = vadd.f32 %v327, %v328
        %v330 = vrot.slane %v329, 2
        %v331 = vadd.f32 %v329, %v330
        %v332 = vrot.slane %v331, 1
        %v333 = vadd.f32 %v331, %v332
        %s334 = vtos %v333
        %v335 = vlog2.pop %v125
        %v336 = vmul.f32 %v335, 0.6931472
        %v337 = vsub.f32 0.0, %v336
        %v338 = vmul.f32 %v125, 0.5
        %v339 = vmul.f32 %v338, %v125
        %v340 = vadd.f32 %v337, %v339
        %v341 = vsub.f32 %v340, 0.5
        %v342 = vsel %vm126, %v341, 0.0
        %343 = vadd.xlane.f32.xlu0 %v342
        %v344 = vpop.xlane.xlu0 %343
        %v345 = vrot.slane %v344, 4
        %v346 = vadd.f32 %v344, %v345
        %v347 = vrot.slane %v346, 2
        %v348 = vadd.f32 %v346, %v347
        %v349 = vrot.slane %v348, 1
        %v350 = vadd.f32 %v348, %v349
        %s351 = vtos %v350
        %v352 = vlog2.pop %v248
        %v353 = vmul.f32 %v352, 0.6931472
        %v354 = vsel %vm251, %v353, 0.0
        %355 = vadd.xlane.f32.xlu0 %v354
        %v356 = vpop.xlane.xlu0 %355
        %v357 = vrot.slane %v356, 4
        %v358 = vadd.f32 %v356, %v357
        %v359 = vrot.slane %v358, 2
        %v360 = vadd.f32 %v358, %v359
        %v361 = vrot.slane %v360, 1
        %v362 = vadd.f32 %v360, %v361
        %s363 = vtos %v362
        %s364 = sadd.f32 %s363, 14.703016
        %s365 = smul.f32 %s105, %s364
        %s366 = smul.f32 %s105, %s351
        %s367 = sadd.f32 %s315, %s334
        %s368 = smul.f32 %s367, %s104
        %s369 = sadd.f32 %s366, %s368
        %s370 = smul.f32 %s103, %s369
        %s371 = sadd.f32 %s365, %s370
        %372 = sst [smem:[%s253]] %s371
      $region57: #{tpu_custom_call.1} parent=52 // pred_fallthru
        _
    $region53: #{tpu_custom_call.1} parent=1 // pred_fallthru
      _
    %v373 = vld [vmem:[%s95] sm:$0xff]
    %v374 = vld [vmem:[#allocation3] sm:$0x1]
    %v375 = vld [vmem:[%s101] sm:$0xff]
    %v377 = vlaneseq
    %v378 = vshrl.u32 %v377, 7
    %v379 = vsub.s32 0, %v378
    %v380 = vrot.slane %v374, %v379
    %v382 = vmul.f32 %v380, %v375
    %v383 = vadd.f32 %v373, %v382
    %v384 = vld [vmem:[#allocation2] sm:$0xff]
    %v385 = vld [vmem:[#allocation2 + $0x8] sm:$0xff]
    %v386 = vld [vmem:[#allocation2 + $0x10] sm:$0xff]
    %v387 = vld [vmem:[#allocation2 + $0x18] sm:$0xff]
    %vm388 = vcmask 261120
    %v390 = vsel %vm388, %v383, 0
    %392 = vmatprep.subr.mxu0 0.0
    %393 = vmatpush1.msra.mxu0 %v384
    %394 = vmatprep.subr.mxu0 0.0
    %395 = vmatpush1.msra.mxu0 %v385
    %396 = vmatprep.subr.mxu0 0.0
    %397 = vmatpush1.msra.mxu0 %v386
    %398 = vmatprep.subr.mxu0 0.0
    %399 = vmatpush1.msra.mxu0 %v387
    %400 = vmatprep.subr.mxu0 0.0
    %401 = vmatpush1.msra.mxu0 0.0
    %402 = vmatprep.subr.mxu0 0.0
    %403 = vmatpush1.msra.mxu0 0.0
    %404 = vmatprep.subr.mxu0 0.0
    %405 = vmatpush1.msra.mxu0 0.0
    %406 = vmatprep.subr.mxu0 0.0
    %407 = vmatpush1.msra.mxu0 0.0
    %408 = vmatprep.subr.mxu0 0.0
    %409 = vmatpush1.msra.mxu0 0.0
    %410 = vmatprep.subr.mxu0 0.0
    %411 = vmatpush1.msra.mxu0 0.0
    %412 = vmatprep.subr.mxu0 0.0
    %413 = vmatpush1.msra.mxu0 0.0
    %414 = vmatprep.subr.mxu0 0.0
    %415 = vmatpush1.msra.mxu0 0.0
    %416 = vmatprep.subr.mxu0 0.0
    %417 = vmatpush1.msra.mxu0 0.0
    %418 = vmatprep.subr.mxu0 0.0
    %419 = vmatpush1.msra.mxu0 0.0
    %420 = vmatprep.subr.mxu0 0.0
    %421 = vmatpush1.msra.mxu0 0.0
    %422 = vmatprep.subr.mxu0 0.0
    %423 = vmatpush1.msra.mxu0 0.0
    %424 = vmatprep.subr.mxu0 0.0
    %425 = vmatpush1.msra.mxu0 0.0
    %426 = vmatprep.subr.mxu0 0.0
    %427 = vmatpush1.msra.mxu0 0.0
    %428 = vmatprep.subr.mxu0 0.0
    %429 = vmatpush1.msra.mxu0 0.0
    %430 = vmatprep.subr.mxu0 0.0
    %431 = vmatpush1.msra.mxu0 0.0
    %432 = vmatprep.subr.mxu0 0.0
    %433 = vmatpush1.msra.mxu0 0.0
    %434 = vmatprep.subr.mxu0 0.0
    %435 = vmatpush1.msra.mxu0 0.0
    %436 = vmatprep.subr.mxu0 0.0
    %437 = vmatpush1.msra.mxu0 0.0
    %438 = vmatprep.subr.mxu0 0.0
    %439 = vmatpush1.msra.mxu0 0.0
    %440 = vmatprep.subr.mxu0 0.0
    %441 = vmatpush1.msra.mxu0 0.0
    %442 = vmatprep.subr.mxu0 0.0
    %443 = vmatpush1.msra.mxu0 0.0
    %444 = vmatprep.subr.mxu0 0.0
    %445 = vmatpush1.msra.mxu0 0.0
    %446 = vmatprep.subr.mxu0 0.0
    %447 = vmatpush1.msra.mxu0 0.0
    %448 = vmatprep.subr.mxu0 0.0
    %449 = vmatpush1.msra.mxu0 0.0
    %450 = vmatprep.subr.mxu0 0.0
    %451 = vmatpush1.msra.mxu0 0.0
    %452 = vmatprep.subr.mxu0 0.0
    %453 = vmatpush1.msra.mxu0 0.0
    %454 = vmatprep.subr.mxu0 0.0
    %455 = vmatpush1.msra.mxu0 0.0
    %456 = vmatprep.mubr.f32.mxu0 0.0
    %457 = vmatmul.mubr.f32.gmra.mrb[0].mxu0 %v390
    %v458 = vpop.f32.mrb[0].mxu0
    %v459 = vadd.f32 0.0, %v458
    %v460 = vpop.f32.mrb[0].mxu0
    %461 = vdwg.mxu0
    %v462 = vld [vmem:[%s89] sm:$0xff]
    %v463 = vsub.f32 %v462, %v459
    %v464 = vld [vmem:[#allocation4] sm:$0x1]
    %v466 = vlaneseq
    %v467 = vshrl.u32 %v466, 7
    %v468 = vsub.s32 0, %v467
    %v469 = vrot.slane %v464, %v468
    %v471 = vmul.f32 %v463, %v469
    %v472 = vmul.f32 %v471, %v471
    %vm473 = vcmask 130048
    %v474 = vsel %vm473, %v472, 0.0
    %475 = vadd.xlane.f32.xlu0 %v474
    %v476 = vpop.xlane.xlu0 %475
    %v477 = vmul.f32 %v476, 0.5
    %s478 = smul.f32 %s103, 0.5
    %v479 = vmul.f32 %v373, %v373
    %v480 = vsel %vm388, %v479, 0.0
    %481 = vadd.xlane.f32.xlu0 %v480
    %v482 = vpop.xlane.xlu0 %481
    %v483 = vstv %s478
    %v484 = vmul.f32 %v483, %v482
    %v485 = vadd.f32 %v477, %v484
    %s486 = sld [smem:[#allocation5]]
    %vm487 = vcmask 7168
    %v488 = vsel %vm487, %v485, 0.0
    %489 = vadd.xlane.f32.xlu0 %v488
    %v490 = vpop.xlane.xlu0 %489
    %v491 = vrot.slane %v490, 4
    %v492 = vadd.f32 %v490, %v491
    %v493 = vrot.slane %v492, 2
    %v494 = vadd.f32 %v492, %v493
    %v495 = vrot.slane %v494, 1
    %v496 = vadd.f32 %v494, %v495
    %s497 = vtos %v496
    %s498 = sadd.f32 %s486, %s497
    %s499 = scalar_lea.smem [#allocation5], 0
    %500 = sst [smem:[%s499]] %s498
    // Predicated region
    $region58: #{tpu_custom_call.1} parent=1 // pred_check
      %p501 = pneg %p106
    $region59: #{tpu_custom_call.1} parent=1 // pred_check_branch
      %503 = sbr.rel (%p501) target = $region61
    $region60: #{tpu_custom_call.1} parent=1 // pred_region
      %s504 = sld [smem:[#allocation5]]
      %v505 = vstv %s504
      %506 = vst [vmem:[#allocation9] sm:$0xff] %v505
    $region61: #{tpu_custom_call.1} parent=1 // pred_fallthru
      _
    // Predicated region
    $region62: #{tpu_custom_call.1} parent=1 // pred_check
      _
    $region63: #{tpu_custom_call.1} parent=1 // pred_check_branch
      %508 = sbr.rel (0) target = $region65
    $region64: #{tpu_custom_call.1} parent=1 // pred_region
      %s510 = ssub.s32 128, 128
      %511 = vsyncadd [#allocation7], %s510
      %s513 = sshll.u32 [#allocation9], 4
      %s514 = int_to_ptr.vmem [resolvable:$true] %s513
      %516 = dma.vmem_to_hbm [thread:$0]  %s514, 128, %s11, [#allocation7]
    $region65: #{tpu_custom_call.1} parent=1 // pred_fallthru
      _
    // Predicated region
    $region66: #{tpu_custom_call.1} parent=1 // pred_check
      _
    $region67: #{tpu_custom_call.1} parent=1 // pred_check_branch
      %518 = sbr.rel (0) target = $region69
    $region68: #{tpu_custom_call.1} parent=1 // pred_region
      %519 = dma.done [#allocation7], 128
    $region69: #{tpu_custom_call.1} parent=1 // pred_fallthru
      _
    %520 = vsyncpa [#allocation7], 1
    %521 = vsyncpa [#allocation8], 1

</llo_original>
